<compile_context>
chip_gen: v5e
topology: v5e:2x2
jax: 0.10.0
libtpu: 0.0.40
codegen_flags: <defaults>
</compile_context>

<pallas_src>
import functools

import jax
import jax.numpy as jnp
from jax.experimental import pallas as pl
from jax.experimental.pallas import tpu as pltpu

BN_EPS = 1e-5


def _neck_kernel(x_ref, w1_ref, b1_ref, gamma_ref, beta_ref, w2_ref, b2_ref,
                 o_ref, acc_ref, *, inv_pool):
    k = pl.program_id(0)

    @pl.when(k == 0)
    def _init():
        acc_ref[...] = jnp.zeros_like(acc_ref)

    # x tile: (N, S, TC) with the feature chunk on the lane axis. Adaptive avg-pool
    # == mean over the spatial (sublane) axis; computed in f32.
    x = x_ref[...].astype(jnp.float32)
    pooled = jnp.sum(x, axis=1) * inv_pool                      # (N, TC)

    # fc1 partial product on the MXU: bf16 operands, f32 accumulation.
    acc_ref[...] += jnp.dot(pooled.astype(jnp.bfloat16), w1_ref[...],
                            preferred_element_type=jnp.float32)

    @pl.when(k == pl.num_programs(0) - 1)
    def _finalize():
        h = acc_ref[...] + b1_ref[...]                          # (N, HID), f32
        # BatchNorm1d, training mode: biased batch statistics over the full batch.
        # (The batch axis is never tiled, so the stats are exact.)
        mean = jnp.mean(h, axis=0, keepdims=True)
        cent = h - mean
        var = jnp.mean(cent * cent, axis=0, keepdims=True)
        h = cent * jax.lax.rsqrt(var + BN_EPS)
        h = h * gamma_ref[...] + beta_ref[...]
        h = jnp.maximum(h, 0.0)                                 # ReLU
        out = jnp.dot(h.astype(jnp.bfloat16), w2_ref[...],
                      preferred_element_type=jnp.float32) + b2_ref[...]
        o_ref[...] = out.astype(o_ref.dtype)


def _pick_feature_tile(feat):
    # Largest lane-aligned tile dividing the feature axis, preferring >=2 grid steps so
    # the x / w1 streams actually pipeline.
    for tc in (512, 256, 128):
        if feat % tc == 0 and feat // tc >= 2:
            return tc
    for tc in (512, 256, 128):
        if feat % tc == 0:
            return tc
    return feat  # small / odd feature dim: single full-width block


def nonlinear_neck_v2(x_nchw, params, with_avg_pool=True):
    """x_nchw: (N, C, H, W). Returns a single-element list with (N, out_channels) f32."""
    N, C, H, W = x_nchw.shape
    if with_avg_pool:
        # Lane-dense layout: feature axis (C) on the 128-lane axis, spatial on sublanes.
        x3 = jnp.transpose(x_nchw.reshape(N, C, H * W), (0, 2, 1))    # (N, S, C)
        feat, spatial = C, H * W
    else:
        # Flattened features straight to the lane axis; pooling degenerates to identity.
        x3 = x_nchw.reshape(N, 1, C * H * W)                           # (N, 1, C*H*W)
        feat, spatial = C * H * W, 1

    w1, b1 = params["w1"], params["b1"]
    gamma, beta = params["gamma"], params["beta"]
    w2, b2 = params["w2"], params["b2"]
    hid = w1.shape[1]
    out_channels = w2.shape[1]
    assert w1.shape[0] == feat, "fc1 in_features must match the (pooled) feature dim"

    tc = _pick_feature_tile(feat)
    grid = (feat // tc,)

    # VMEM budget: double-buffered x / w1 tiles + resident small operands + scratch.
    def nbytes(shape, dtype):
        sz = 1
        for d in shape:
            sz *= d
        return sz * jnp.dtype(dtype).itemsize

    est = (2 * nbytes((N, spatial, tc), x3.dtype)
           + 2 * nbytes((tc, hid), w1.dtype)
           + 2 * (nbytes((1, hid), b1.dtype) + nbytes((1, hid), gamma.dtype)
                  + nbytes((1, hid), beta.dtype) + nbytes((1, out_channels), b2.dtype))
           + 2 * nbytes((hid, out_channels), w2.dtype)
           + 2 * nbytes((N, out_channels), jnp.float32)
           + nbytes((N, hid), jnp.float32))
    vmem_limit = int(min(max(2 * est, 16 << 20), 96 << 20))
    # TODO(synk): for very large hid on v7x (64 MiB VMEM) add a second grid axis over hid
    # (sliced w1 / acc), and switch BN to a two-phase sum/sumsq reduction if the batch
    # axis is ever tiled.

    kernel = functools.partial(_neck_kernel, inv_pool=1.0 / float(spatial))

    out = pl.pallas_call(
        kernel,
        out_shape=jax.ShapeDtypeStruct((N, out_channels), jnp.float32),
        grid_spec=pltpu.PrefetchScalarGridSpec(
            num_scalar_prefetch=0,
            grid=grid,
            in_specs=[
                pl.BlockSpec((N, spatial, tc), lambda k: (0, 0, k)),   # x (streamed)
                pl.BlockSpec((tc, hid), lambda k: (k, 0)),             # w1 (streamed)
                pl.BlockSpec((1, hid), lambda k: (0, 0)),              # b1 (resident)
                pl.BlockSpec((1, hid), lambda k: (0, 0)),              # gamma
                pl.BlockSpec((1, hid), lambda k: (0, 0)),              # beta
                pl.BlockSpec((hid, out_channels), lambda k: (0, 0)),   # w2 (resident)
                pl.BlockSpec((1, out_channels), lambda k: (0, 0)),     # b2
            ],
            out_specs=pl.BlockSpec((N, out_channels), lambda k: (0, 0)),
            scratch_shapes=[pltpu.VMEM((N, hid), jnp.float32)],        # fc1 accumulator
        ),
        compiler_params=pltpu.CompilerParams(
            dimension_semantics=("arbitrary",),   # fc1 reduction axis
            vmem_limit_bytes=vmem_limit,
        ),
    )(x3, w1, b1, gamma, beta, w2, b2)
    return [out]


def init_params(key, in_channels, hid_channels, out_channels, std=0.01):
    # Matches _init_weights(init_linear='normal'): Linear weight ~ N(0, std), bias = 0;
    # BatchNorm weight = 1, bias = 0. Weights stored transposed (in, out) and in bf16
    # for the MXU; biases / BN affine kept in f32.
    k1, k2 = jax.random.split(key)
    w1 = (jax.random.normal(k1, (hid_channels, in_channels), jnp.float32) * std).T
    w2 = (jax.random.normal(k2, (out_channels, hid_channels), jnp.float32) * std).T
    return {
        "w1": jnp.asarray(w1, jnp.bfloat16),
        "b1": jnp.zeros((1, hid_channels), jnp.float32),
        "gamma": jnp.ones((1, hid_channels), jnp.float32),
        "beta": jnp.zeros((1, hid_channels), jnp.float32),
        "w2": jnp.asarray(w2, jnp.bfloat16),
        "b2": jnp.zeros((1, out_channels), jnp.float32),
    }


def _reference(x_nchw, params, with_avg_pool=True):
    # Pure-JAX reference following the same bf16-operand / f32-accumulate math path.
    N, C, H, W = x_nchw.shape
    if with_avg_pool:
        feat = jnp.mean(x_nchw.astype(jnp.float32), axis=(2, 3))
    else:
        feat = x_nchw.reshape(N, -1).astype(jnp.float32)
    h = jnp.dot(feat.astype(jnp.bfloat16), params["w1"],
                preferred_element_type=jnp.float32) + params["b1"]
    mean = jnp.mean(h, axis=0, keepdims=True)
    var = jnp.mean((h - mean) ** 2, axis=0, keepdims=True)
    h = (h - mean) * jax.lax.rsqrt(var + BN_EPS)
    h = h * params["gamma"] + params["beta"]
    h = jnp.maximum(h, 0.0)
    return jnp.dot(h.astype(jnp.bfloat16), params["w2"],
                   preferred_element_type=jnp.float32) + params["b2"]


if __name__ == "__main__":
    key = jax.random.PRNGKey(0)
    kx, kp = jax.random.split(key)

    # Small but tile-friendly shapes: C=256 -> two 128-wide feature tiles, which exercises
    # the streamed fc1 accumulation and the pl.when init/finalize phases.
    N, C, H, W = 8, 256, 8, 8
    hid_channels, out_channels = 256, 128

    x = jax.random.normal(kx, (N, C, H, W), jnp.float32)
    params = init_params(kp, in_channels=C, hid_channels=hid_channels,
                         out_channels=out_channels)

    out = nonlinear_neck_v2(x, params, with_avg_pool=True)[0]
    out = jax.block_until_ready(out)

    ref = _reference(x, params, with_avg_pool=True)
    assert out.shape == (N, out_channels)
    assert jnp.allclose(out, ref, atol=2e-3, rtol=2e-2), "mismatch vs JAX reference"
    print("KERNEL_OK")
</pallas_src>

<mosaic_0001>
module attributes {stable_mosaic.version = 11 : i64} {
  func.func @_neck_kernel(%arg0: i32, %arg1: memref<8x64x128xf32, #tpu.memory_space<vmem>>, %arg2: memref<128x256xbf16, #tpu.memory_space<vmem>>, %arg3: memref<1x256xf32, #tpu.memory_space<vmem>>, %arg4: memref<1x256xf32, #tpu.memory_space<vmem>>, %arg5: memref<1x256xf32, #tpu.memory_space<vmem>>, %arg6: memref<256x128xbf16, #tpu.memory_space<vmem>>, %arg7: memref<1x128xf32, #tpu.memory_space<vmem>>, %arg8: memref<8x128xf32, #tpu.memory_space<vmem>>, %arg9: memref<8x256xf32, #tpu.memory_space<vmem>>) attributes {dimension_semantics = [#tpu.dimension_semantics<arbitrary>], iteration_bounds = array<i64: 2>, scalar_prefetch = 0 : i64, scratch_operands = 1 : i64, tpu.core_type = #tpu.core_type<tc>, window_params = [{transform_indices = @transform_0, window_bounds = array<i64: 8, 64, 128>}, {transform_indices = @transform_1, window_bounds = array<i64: 128, 256>}, {pipeline_mode = #tpu.pipeline_mode<synchronous>, transform_indices = @transform_2, window_bounds = array<i64: 1, 256>}, {pipeline_mode = #tpu.pipeline_mode<synchronous>, transform_indices = @transform_3, window_bounds = array<i64: 1, 256>}, {pipeline_mode = #tpu.pipeline_mode<synchronous>, transform_indices = @transform_4, window_bounds = array<i64: 1, 256>}, {pipeline_mode = #tpu.pipeline_mode<synchronous>, transform_indices = @transform_5, window_bounds = array<i64: 256, 128>}, {pipeline_mode = #tpu.pipeline_mode<synchronous>, transform_indices = @transform_6, window_bounds = array<i64: 1, 128>}, {pipeline_mode = #tpu.pipeline_mode<synchronous>, transform_indices = @transform_7, window_bounds = array<i64: 8, 128>}]} {
    %c0_i32 = arith.constant 0 : i32
    %0 = arith.cmpi eq, %arg0, %c0_i32 : i32
    %1 = arith.extui %0 : i1 to i32
    %c0_i32_0 = arith.constant 0 : i32
    %2 = arith.cmpi ne, %1, %c0_i32_0 : i32
    scf.if %2 {
      %cst_12 = arith.constant 0.000000e+00 : f32
      %16 = vector.broadcast %cst_12 : f32 to vector<8x256xf32>
      %c0_13 = arith.constant 0 : index
      %c0_14 = arith.constant 0 : index
      %17 = vector.load %arg9[%c0_13, %c0_14] : memref<8x256xf32, #tpu.memory_space<vmem>>, vector<8x256xf32>
      tpu.vector_store %arg9[%c0_13, %c0_14], %16 {strides = array<i32>} : memref<8x256xf32, #tpu.memory_space<vmem>>, vector<8x256xf32>,
    } else {
    }
    %c0 = arith.constant 0 : index
    %c0_1 = arith.constant 0 : index
    %c0_2 = arith.constant 0 : index
    %3 = vector.load %arg1[%c0, %c0_1, %c0_2] : memref<8x64x128xf32, #tpu.memory_space<vmem>>, vector<8x64x128xf32>
    %cst = arith.constant dense<0.000000e+00> : vector<8x128xf32>
    %4 = vector.multi_reduction <add>, %3, %cst [1] : vector<8x64x128xf32> to vector<8x128xf32>
    %cst_3 = arith.constant 1.562500e-02 : f32
    %5 = vector.broadcast %cst_3 : f32 to vector<8x128xf32>
    %6 = arith.mulf %4, %5 : vector<8x128xf32>
    %c0_4 = arith.constant 0 : index
    %c0_5 = arith.constant 0 : index
    %7 = vector.load %arg9[%c0_4, %c0_5] : memref<8x256xf32, #tpu.memory_space<vmem>>, vector<8x256xf32>
    %8 = arith.truncf %6 : vector<8x128xf32> to vector<8x128xbf16>
    %c0_6 = arith.constant 0 : index
    %c0_7 = arith.constant 0 : index
    %9 = vector.load %arg2[%c0_6, %c0_7] : memref<128x256xbf16, #tpu.memory_space<vmem>>, vector<128x256xbf16>
    %cst_8 = arith.constant dense<0.000000e+00> : vector<8x256xf32>
    %10 = tpu.matmul %8, %9, %cst_8 {dimension_numbers = #tpu.dot_dimension_numbers<[1], [0], [0], [1], [0, 0, 1, 1], [], []>} : vector<8x128xbf16>, vector<128x256xbf16>, vector<8x256xf32> -> vector<8x256xf32>
    %11 = arith.addf %7, %10 : vector<8x256xf32>
    %c0_9 = arith.constant 0 : index
    %c0_10 = arith.constant 0 : index
    %12 = vector.load %arg9[%c0_9, %c0_10] : memref<8x256xf32, #tpu.memory_space<vmem>>, vector<8x256xf32>
    tpu.vector_store %arg9[%c0_9, %c0_10], %11 {strides = array<i32>} : memref<8x256xf32, #tpu.memory_space<vmem>>, vector<8x256xf32>,
    %c1_i32 = arith.constant 1 : i32
    %13 = arith.cmpi eq, %arg0, %c1_i32 : i32
    %14 = arith.extui %13 : i1 to i32
    %c0_i32_11 = arith.constant 0 : i32
    %15 = arith.cmpi ne, %14, %c0_i32_11 : i32
    scf.if %15 {
      %c0_12 = arith.constant 0 : index
      %c0_13 = arith.constant 0 : index
      %16 = vector.load %arg9[%c0_12, %c0_13] : memref<8x256xf32, #tpu.memory_space<vmem>>, vector<8x256xf32>
      %c0_14 = arith.constant 0 : index
      %c0_15 = arith.constant 0 : index
      %17 = vector.load %arg3[%c0_14, %c0_15] : memref<1x256xf32, #tpu.memory_space<vmem>>, vector<1x256xf32>
      %18 = vector.broadcast %17 : vector<1x256xf32> to vector<8x256xf32>
      %19 = arith.addf %16, %18 : vector<8x256xf32>
      %cst_16 = arith.constant dense<0.000000e+00> : vector<256xf32>
      %20 = vector.multi_reduction <add>, %19, %cst_16 [0] : vector<8x256xf32> to vector<256xf32>
      %21 = vector.shape_cast %20 : vector<256xf32> to vector<1x256xf32>
      %cst_17 = arith.constant 8.000000e+00 : f32
      %22 = vector.broadcast %cst_17 : f32 to vector<1x256xf32>
      %23 = arith.divf %21, %22 : vector<1x256xf32>
      %24 = vector.broadcast %23 : vector<1x256xf32> to vector<8x256xf32>
      %25 = arith.subf %19, %24 : vector<8x256xf32>
      %26 = arith.mulf %25, %25 : vector<8x256xf32>
      %cst_18 = arith.constant dense<0.000000e+00> : vector<256xf32>
      %27 = vector.multi_reduction <add>, %26, %cst_18 [0] : vector<8x256xf32> to vector<256xf32>
      %28 = vector.shape_cast %27 : vector<256xf32> to vector<1x256xf32>
      %cst_19 = arith.constant 8.000000e+00 : f32
      %29 = vector.broadcast %cst_19 : f32 to vector<1x256xf32>
      %30 = arith.divf %28, %29 : vector<1x256xf32>
      %cst_20 = arith.constant 9.99999974E-6 : f32
      %31 = vector.broadcast %cst_20 : f32 to vector<1x256xf32>
      %32 = arith.addf %30, %31 : vector<1x256xf32>
      %33 = math.rsqrt %32 : vector<1x256xf32>
      %34 = vector.broadcast %33 : vector<1x256xf32> to vector<8x256xf32>
      %35 = arith.mulf %25, %34 : vector<8x256xf32>
      %c0_21 = arith.constant 0 : index
      %c0_22 = arith.constant 0 : index
      %36 = vector.load %arg4[%c0_21, %c0_22] : memref<1x256xf32, #tpu.memory_space<vmem>>, vector<1x256xf32>
      %37 = vector.broadcast %36 : vector<1x256xf32> to vector<8x256xf32>
      %38 = arith.mulf %35, %37 : vector<8x256xf32>
      %c0_23 = arith.constant 0 : index
      %c0_24 = arith.constant 0 : index
      %39 = vector.load %arg5[%c0_23, %c0_24] : memref<1x256xf32, #tpu.memory_space<vmem>>, vector<1x256xf32>
      %40 = vector.broadcast %39 : vector<1x256xf32> to vector<8x256xf32>
      %41 = arith.addf %38, %40 : vector<8x256xf32>
      %cst_25 = arith.constant 0.000000e+00 : f32
      %42 = vector.broadcast %cst_25 : f32 to vector<8x256xf32>
      %43 = arith.maximumf %41, %42 : vector<8x256xf32>
      %44 = arith.truncf %43 : vector<8x256xf32> to vector<8x256xbf16>
      %c0_26 = arith.constant 0 : index
      %c0_27 = arith.constant 0 : index
      %45 = vector.load %arg6[%c0_26, %c0_27] : memref<256x128xbf16, #tpu.memory_space<vmem>>, vector<256x128xbf16>
      %cst_28 = arith.constant dense<0.000000e+00> : vector<8x128xf32>
      %46 = tpu.matmul %44, %45, %cst_28 {dimension_numbers = #tpu.dot_dimension_numbers<[1], [0], [0], [1], [0, 0, 1, 1], [], []>} : vector<8x256xbf16>, vector<256x128xbf16>, vector<8x128xf32> -> vector<8x128xf32>
      %c0_29 = arith.constant 0 : index
      %c0_30 = arith.constant 0 : index
      %47 = vector.load %arg7[%c0_29, %c0_30] : memref<1x128xf32, #tpu.memory_space<vmem>>, vector<1x128xf32>
      %48 = vector.broadcast %47 : vector<1x128xf32> to vector<8x128xf32>
      %49 = arith.addf %46, %48 : vector<8x128xf32>
      %c0_31 = arith.constant 0 : index
      %c0_32 = arith.constant 0 : index
      %50 = vector.load %arg8[%c0_31, %c0_32] : memref<8x128xf32, #tpu.memory_space<vmem>>, vector<8x128xf32>
      tpu.vector_store %arg8[%c0_31, %c0_32], %49 {strides = array<i32>} : memref<8x128xf32, #tpu.memory_space<vmem>>, vector<8x128xf32>,
    } else {
    }
    return
  }
  func.func @transform_0(%arg0: i32) -> (i32, i32, i32) {
    %c0_i32 = arith.constant 0 : i32
    %c0_i32_0 = arith.constant 0 : i32
    %c0_i32_1 = arith.constant 0 : i32
    return %c0_i32, %c0_i32_0, %arg0 : i32, i32, i32
  }
  func.func @transform_1(%arg0: i32) -> (i32, i32) {
    %c0_i32 = arith.constant 0 : i32
    %c0_i32_0 = arith.constant 0 : i32
    return %arg0, %c0_i32 : i32, i32
  }
  func.func @transform_2(%arg0: i32) -> (i32, i32) {
    %c0_i32 = arith.constant 0 : i32
    %c0_i32_0 = arith.constant 0 : i32
    %c0_i32_1 = arith.constant 0 : i32
    return %c0_i32, %c0_i32_0 : i32, i32
  }
  func.func @transform_3(%arg0: i32) -> (i32, i32) {
    %c0_i32 = arith.constant 0 : i32
    %c0_i32_0 = arith.constant 0 : i32
    %c0_i32_1 = arith.constant 0 : i32
    return %c0_i32, %c0_i32_0 : i32, i32
  }
  func.func @transform_4(%arg0: i32) -> (i32, i32) {
    %c0_i32 = arith.constant 0 : i32
    %c0_i32_0 = arith.constant 0 : i32
    %c0_i32_1 = arith.constant 0 : i32
    return %c0_i32, %c0_i32_0 : i32, i32
  }
  func.func @transform_5(%arg0: i32) -> (i32, i32) {
    %c0_i32 = arith.constant 0 : i32
    %c0_i32_0 = arith.constant 0 : i32
    %c0_i32_1 = arith.constant 0 : i32
    return %c0_i32, %c0_i32_0 : i32, i32
  }
  func.func @transform_6(%arg0: i32) -> (i32, i32) {
    %c0_i32 = arith.constant 0 : i32
    %c0_i32_0 = arith.constant 0 : i32
    %c0_i32_1 = arith.constant 0 : i32
    return %c0_i32, %c0_i32_0 : i32, i32
  }
  func.func @transform_7(%arg0: i32) -> (i32, i32) {
    %c0_i32 = arith.constant 0 : i32
    %c0_i32_0 = arith.constant 0 : i32
    %c0_i32_1 = arith.constant 0 : i32
    return %c0_i32, %c0_i32_0 : i32, i32
  }
}

</mosaic_0001>

<llo_original>
// kernel: tpu_custom_call.1
$region0: #{tpu_custom_call.1}
  #allocation0 [shape = 'u32[]', space=smem, size = 0x4, offset = 0x4, fixed_abs, tag = 'smem constant byte address 0x4 - core index']
  #allocation1 [shape = 'u32[72,128]{1,0:T(1,128)}', space=vmem, size = 0x9000, scoped, tag = 'internal scratch']
  #allocation2 [shape = 'f32[8,256]{1,0:T(8,128)}', space=vmem, size = 0x2000, scoped, tag = 'scratch operand']
  %s0 = inlined_call_operand.hbm [shape: f32[8,64,256], index: 0, kind: input, shape index: {}]
  %s1 = inlined_call_operand.hbm [shape: bf16[256,256], index: 1, kind: input, shape index: {}]
  %s2 = inlined_call_operand.hbm [shape: f32[1,256], index: 2, kind: input, shape index: {}]
  %s3 = inlined_call_operand.vmem [shape: f32[1,256], index: 3, kind: input, shape index: {}]
  %s4 = inlined_call_operand.hbm [shape: f32[1,256], index: 4, kind: input, shape index: {}]
  %s5 = inlined_call_operand.hbm [shape: bf16[256,128], index: 5, kind: input, shape index: {}]
  %s6 = inlined_call_operand.vmem [shape: f32[1,128], index: 6, kind: input, shape index: {}]
  %s7 = inlined_call_operand.hbm [shape: f32[8,128], index: 7, kind: output, shape index: {}]
  %s8 = sld [smem:[#allocation0]]
  $region89: #{tpu_custom_call.1} parent=0
    _
  %s10 = ssub.s32 1, %s8
  %s11 = scalar_select 0, %s10, %s8
  $region1: #{tpu_custom_call.1} parent=0
    #allocation3 [shape = 'u8[524288]{0}', space=vmem, size = 0x80000, scoped, tag = 'input window, operand 0']
    #allocation4 [shape = 's32[2]{0}', space=sflag, size = 0x8, scoped, tag = 'scoped memory for tpu_custom_call.1']
    #allocation5 [shape = 's32[2]{0}', space=sflag, size = 0x8, scoped, tag = 'scoped memory for tpu_custom_call.1']
    #allocation6 [shape = 'u8[131072]{0}', space=vmem, size = 0x20000, scoped, tag = 'input window, operand 1']
    #allocation7 [shape = 's32[2]{0}', space=sflag, size = 0x8, scoped, tag = 'scoped memory for tpu_custom_call.1']
    #allocation8 [shape = 'u8[1024]{0}', space=vmem, size = 0x400, scoped, tag = 'input window, operand 2, single buffered']
    #allocation9 [shape = 'u8[1024]{0}', space=vmem, size = 0x400, scoped, tag = 'input window, operand 4, single buffered']
    #allocation10 [shape = 's32[1]{0}', space=sflag, size = 0x4, scoped, tag = 'scoped memory for tpu_custom_call.1']
    #allocation11 [shape = 'u8[65536]{0}', space=vmem, size = 0x10000, scoped, tag = 'input window, operand 5, single buffered']
    #allocation12 [shape = 'u8[4096]{0}', space=vmem, size = 0x1000, scoped, tag = 'output window, operand 0, single buffered']
    %12 = vsyncpa [#allocation4], 0
    %s13 = scalar_lea.sflag [#allocation4], 1
    %14 = vsyncpa %s13, 0
    %15 = vsyncpa [#allocation7], 0
    %s16 = scalar_lea.sflag [#allocation7], 1
    %17 = vsyncpa %s16, 0
    %18 = vsyncpa [#allocation10], 0
    %19 = vsyncpa [#allocation5], 0
    loop: start=0, step=1, limit=4
    $region2: #{tpu_custom_call.1} parent=1 // loop_pre_header
      _
    $region3: #{tpu_custom_call.1} parent=1 // loop_header
      %s21 = sphi 0, %s25
      %p22 = scmp.ge.s32.totalorder %s21, 4
      %s31 = sphi 0, %s33
      %s34 = sphi 0, %s31
      %s35 = sphi 0, %s34
      %s51 = sphi 0, %s35
      %s57 = sphi 0, %s59
      %s60 = sphi 0, %s57
      %s61 = sphi 0, %s60
      %s77 = sphi 0, %s61
      %s81 = sphi 0, %s81
      %s83 = sphi 0, %s81
      %s84 = sphi 0, %s83
      %s98 = sphi 0, %s84
      %s102 = sphi 0, %s102
      %s104 = sphi 0, %s102
      %s105 = sphi 0, %s104
      %s119 = sphi 0, %s105
      %s123 = sphi 0, %s123
      %s125 = sphi 0, %s123
      %s126 = sphi 0, %s125
      %s140 = sphi 0, %s126
      %s144 = sphi 0, %s144
      %s146 = sphi 0, %s144
      %s147 = sphi 0, %s146
      %s161 = sphi 0, %s147
      %s165 = sphi 0, %s165
      %s167 = sphi 0, %s165
      %s168 = sphi 0, %s167
      %s182 = sphi 0, %s168
      %s186 = sphi 0, %s186
      %s188 = sphi 0, %s186
      %s189 = sphi 0, %s188
      %s203 = sphi 0, %s189
    $region4: #{tpu_custom_call.1} parent=1 // loop_header_branch
      %24 = sbr.rel (%p22) target = $region8
    $region5: #{tpu_custom_call.1} parent=1 // loop_body
      %s26 = ssub.s32 %s21, 1
      %s27 = ssub.s32 %s21, 2
      %s28 = sadd.s32 %s21, 1
      %s29 = ssub.s32 %s21, %s28
      %p30 = scmp.eq.s32.totalorder %s29, 0
      %s32 = sadd.s32 %s31, 1
      %s33 = scalar_select %p30, %s31, %s32
      %p36 = pneg %p30
      %p37 = scmp.eq.s32.totalorder %s21, 1
      %p38 = por %p36, %p37
      %p39 = scmp.ne.s32.totalorder %s31, %s34
      %p40 = scmp.eq.s32.totalorder %s21, 0
      %p41 = por %p39, %p40
      %p42 = scmp.ne.s32.totalorder %s31, %s34
      %p43 = scmp.eq.s32.totalorder %s26, 1
      %p44 = por %p42, %p43
      %p45 = scmp.ne.s32.totalorder %s34, %s35
      %p46 = scmp.eq.s32.totalorder %s26, 0
      %p47 = por %p45, %p46
      %p48 = scmp.ne.s32.totalorder %s34, %s35
      %p49 = scmp.eq.s32.totalorder %s27, 1
      %p50 = por %p48, %p49
      %p52 = scmp.ne.s32.totalorder %s35, %s51
      %p53 = scmp.eq.s32.totalorder %s27, 0
      %p54 = por %p52, %p53
      %s55 = ssub.s32 %s21, %s28
      %p56 = scmp.eq.s32.totalorder %s55, 0
      %s58 = sadd.s32 %s57, 1
      %s59 = scalar_select %p56, %s57, %s58
      %p62 = pneg %p56
      %p63 = scmp.eq.s32.totalorder %s21, 1
      %p64 = por %p62, %p63
      %p65 = scmp.ne.s32.totalorder %s57, %s60
      %p66 = scmp.eq.s32.totalorder %s21, 0
      %p67 = por %p65, %p66
      %p68 = scmp.ne.s32.totalorder %s57, %s60
      %p69 = scmp.eq.s32.totalorder %s26, 1
      %p70 = por %p68, %p69
      %p71 = scmp.ne.s32.totalorder %s60, %s61
      %p72 = scmp.eq.s32.totalorder %s26, 0
      %p73 = por %p71, %p72
      %p74 = scmp.ne.s32.totalorder %s60, %s61
      %p75 = scmp.eq.s32.totalorder %s27, 1
      %p76 = por %p74, %p75
      %p78 = scmp.ne.s32.totalorder %s61, %s77
      %p79 = scmp.eq.s32.totalorder %s27, 0
      %p80 = por %p78, %p79
      %s82 = sadd.s32 %s81, 1
      %p85 = scmp.eq.s32.totalorder %s21, 1
      %p86 = scmp.ne.s32.totalorder %s81, %s83
      %p87 = scmp.eq.s32.totalorder %s21, 0
      %p88 = por %p86, %p87
      %p89 = scmp.ne.s32.totalorder %s81, %s83
      %p90 = scmp.eq.s32.totalorder %s26, 1
      %p91 = por %p89, %p90
      %p92 = scmp.ne.s32.totalorder %s83, %s84
      %p93 = scmp.eq.s32.totalorder %s26, 0
      %p94 = por %p92, %p93
      %p95 = scmp.ne.s32.totalorder %s83, %s84
      %p96 = scmp.eq.s32.totalorder %s27, 1
      %p97 = por %p95, %p96
      %p99 = scmp.ne.s32.totalorder %s84, %s98
      %p100 = scmp.eq.s32.totalorder %s27, 0
      %p101 = por %p99, %p100
      %s103 = sadd.s32 %s102, 1
      %p106 = scmp.eq.s32.totalorder %s21, 1
      %p107 = scmp.ne.s32.totalorder %s102, %s104
      %p108 = scmp.eq.s32.totalorder %s21, 0
      %p109 = por %p107, %p108
      %p110 = scmp.ne.s32.totalorder %s102, %s104
      %p111 = scmp.eq.s32.totalorder %s26, 1
      %p112 = por %p110, %p111
      %p113 = scmp.ne.s32.totalorder %s104, %s105
      %p114 = scmp.eq.s32.totalorder %s26, 0
      %p115 = por %p113, %p114
      %p116 = scmp.ne.s32.totalorder %s104, %s105
      %p117 = scmp.eq.s32.totalorder %s27, 1
      %p118 = por %p116, %p117
      %p120 = scmp.ne.s32.totalorder %s105, %s119
      %p121 = scmp.eq.s32.totalorder %s27, 0
      %p122 = por %p120, %p121
      %s124 = sadd.s32 %s123, 1
      %p127 = scmp.eq.s32.totalorder %s21, 1
      %p128 = scmp.ne.s32.totalorder %s123, %s125
      %p129 = scmp.eq.s32.totalorder %s21, 0
      %p130 = por %p128, %p129
      %p131 = scmp.ne.s32.totalorder %s123, %s125
      %p132 = scmp.eq.s32.totalorder %s26, 1
      %p133 = por %p131, %p132
      %p134 = scmp.ne.s32.totalorder %s125, %s126
      %p135 = scmp.eq.s32.totalorder %s26, 0
      %p136 = por %p134, %p135
      %p137 = scmp.ne.s32.totalorder %s125, %s126
      %p138 = scmp.eq.s32.totalorder %s27, 1
      %p139 = por %p137, %p138
      %p141 = scmp.ne.s32.totalorder %s126, %s140
      %p142 = scmp.eq.s32.totalorder %s27, 0
      %p143 = por %p141, %p142
      %s145 = sadd.s32 %s144, 1
      %p148 = scmp.eq.s32.totalorder %s21, 1
      %p149 = scmp.ne.s32.totalorder %s144, %s146
      %p150 = scmp.eq.s32.totalorder %s21, 0
      %p151 = por %p149, %p150
      %p152 = scmp.ne.s32.totalorder %s144, %s146
      %p153 = scmp.eq.s32.totalorder %s26, 1
      %p154 = por %p152, %p153
      %p155 = scmp.ne.s32.totalorder %s146, %s147
      %p156 = scmp.eq.s32.totalorder %s26, 0
      %p157 = por %p155, %p156
      %p158 = scmp.ne.s32.totalorder %s146, %s147
      %p159 = scmp.eq.s32.totalorder %s27, 1
      %p160 = por %p158, %p159
      %p162 = scmp.ne.s32.totalorder %s147, %s161
      %p163 = scmp.eq.s32.totalorder %s27, 0
      %p164 = por %p162, %p163
      %s166 = sadd.s32 %s165, 1
      %p169 = scmp.eq.s32.totalorder %s21, 1
      %p170 = scmp.ne.s32.totalorder %s165, %s167
      %p171 = scmp.eq.s32.totalorder %s21, 0
      %p172 = por %p170, %p171
      %p173 = scmp.ne.s32.totalorder %s165, %s167
      %p174 = scmp.eq.s32.totalorder %s26, 1
      %p175 = por %p173, %p174
      %p176 = scmp.ne.s32.totalorder %s167, %s168
      %p177 = scmp.eq.s32.totalorder %s26, 0
      %p178 = por %p176, %p177
      %p179 = scmp.ne.s32.totalorder %s167, %s168
      %p180 = scmp.eq.s32.totalorder %s27, 1
      %p181 = por %p179, %p180
      %p183 = scmp.ne.s32.totalorder %s168, %s182
      %p184 = scmp.eq.s32.totalorder %s27, 0
      %p185 = por %p183, %p184
      %s187 = sadd.s32 %s186, 1
      %p190 = scmp.eq.s32.totalorder %s21, 1
      %p191 = scmp.ne.s32.totalorder %s186, %s188
      %p192 = scmp.eq.s32.totalorder %s21, 0
      %p193 = por %p191, %p192
      %p194 = scmp.ne.s32.totalorder %s186, %s188
      %p195 = scmp.eq.s32.totalorder %s26, 1
      %p196 = por %p194, %p195
      %p197 = scmp.ne.s32.totalorder %s188, %s189
      %p198 = scmp.eq.s32.totalorder %s26, 0
      %p199 = por %p197, %p198
      %p200 = scmp.ne.s32.totalorder %s188, %s189
      %p201 = scmp.eq.s32.totalorder %s27, 1
      %p202 = por %p200, %p201
      %p204 = scmp.ne.s32.totalorder %s189, %s203
      %p205 = scmp.eq.s32.totalorder %s27, 0
      %p206 = por %p204, %p205
      %p207 = scmp.le.s32.totalorder 1, %s21
      %p208 = scmp.lt.s32.totalorder %s21, 3
      %p209 = pnand %p207, %p208
      %p210 = pneg %p209
      // Predicated region
      $region9: #{tpu_custom_call.1} parent=5 // pred_check
        _
      $region10: #{tpu_custom_call.1} parent=5 // pred_check_branch
        %212 = sbr.rel (%p209) target = $region12
      $region11: #{tpu_custom_call.1} parent=5 // pred_region
        %s213 = ssub.s32 %s21, 1
        // Predicated region
        $region13: #{tpu_custom_call.1} parent=11 // pred_check
          %p214 = pneg %p94
        $region14: #{tpu_custom_call.1} parent=11 // pred_check_branch
          %216 = sbr.rel (%p214) target = $region16
        $region15: #{tpu_custom_call.1} parent=11 // pred_region
          %218 = vsyncadd [#allocation7], 0
          %s220 = sshll.u32 %s2, 4
          %s221 = int_to_ptr.hbm [resolvable:$true] %s220
          %s222 = sshll.u32 [#allocation8], 4
          %s223 = int_to_ptr.vmem [resolvable:$true] %s222
          %225 = dma.hbm_to_vmem [thread:$0]  %s221, 32, %s223, [#allocation7]
        $region16: #{tpu_custom_call.1} parent=11 // pred_fallthru
          _
        // Predicated region
        $region17: #{tpu_custom_call.1} parent=11 // pred_check
          %p226 = pneg %p115
        $region18: #{tpu_custom_call.1} parent=11 // pred_check_branch
          %228 = sbr.rel (%p226) target = $region20
        $region19: #{tpu_custom_call.1} parent=11 // pred_region
          _
        $region20: #{tpu_custom_call.1} parent=11 // pred_fallthru
          _
        // Predicated region
        $region21: #{tpu_custom_call.1} parent=11 // pred_check
          %p229 = pneg %p136
        $region22: #{tpu_custom_call.1} parent=11 // pred_check_branch
          %231 = sbr.rel (%p229) target = $region24
        $region23: #{tpu_custom_call.1} parent=11 // pred_region
          %233 = vsyncadd [#allocation10], 0
          %s235 = sshll.u32 %s4, 4
          %s236 = int_to_ptr.hbm [resolvable:$true] %s235
          %s237 = sshll.u32 [#allocation9], 4
          %s238 = int_to_ptr.vmem [resolvable:$true] %s237
          %240 = dma.hbm_to_vmem [thread:$0]  %s236, 32, %s238, [#allocation10]
        $region24: #{tpu_custom_call.1} parent=11 // pred_fallthru
          _
        // Predicated region
        $region25: #{tpu_custom_call.1} parent=11 // pred_check
          %p241 = pneg %p157
        $region26: #{tpu_custom_call.1} parent=11 // pred_check_branch
          %243 = sbr.rel (%p241) target = $region28
        $region27: #{tpu_custom_call.1} parent=11 // pred_region
          %245 = vsyncadd [#allocation10], 0
          %s246 = sshll.u32 %s5, 4
          %s247 = int_to_ptr.hbm [resolvable:$true] %s246
          %s248 = sshll.u32 [#allocation11], 4
          %s249 = int_to_ptr.vmem [resolvable:$true] %s248
          %254 = dma.hbm_to_vmem [thread:$0]  %s247, 2048, %s249, [#allocation10], 64, 64, 4
        $region28: #{tpu_custom_call.1} parent=11 // pred_fallthru
          _
        // Predicated region
        $region29: #{tpu_custom_call.1} parent=11 // pred_check
          %p255 = pneg %p178
        $region30: #{tpu_custom_call.1} parent=11 // pred_check_branch
          %257 = sbr.rel (%p255) target = $region32
        $region31: #{tpu_custom_call.1} parent=11 // pred_region
          _
        $region32: #{tpu_custom_call.1} parent=11 // pred_fallthru
          _
      $region12: #{tpu_custom_call.1} parent=5 // pred_fallthru
        _
      %p258 = scmp.lt.s32.totalorder %s21, 2
      // Predicated region
      $region33: #{tpu_custom_call.1} parent=5 // pred_check
        %p259 = pneg %p258
      $region34: #{tpu_custom_call.1} parent=5 // pred_check_branch
        %261 = sbr.rel (%p259) target = $region36
      $region35: #{tpu_custom_call.1} parent=5 // pred_region
        // Predicated region
        $region37: #{tpu_custom_call.1} parent=35 // pred_check
          %p262 = pneg %p41
        $region38: #{tpu_custom_call.1} parent=35 // pred_check_branch
          %264 = sbr.rel (%p262) target = $region40
        $region39: #{tpu_custom_call.1} parent=35 // pred_region
          %s265 = sand.u32 %s31, 1
          %s266 = scalar_lea.sflag [#allocation4], %s265
          %s267 = sand.u32 %s31, 1
          %s268 = smul.addr %s267, 512
          %s269 = scalar_lea.vmem [#allocation3], %s268
          %271 = vsyncadd %s266, 0
          %s272 = smul.addr %s21, 8
          %s273 = scalar_lea.hbm %s0, %s272
          %s274 = sshll.u32 %s273, 4
          %s275 = int_to_ptr.hbm [resolvable:$true] %s274
          %s276 = sshll.u32 %s269, 4
          %s277 = int_to_ptr.vmem [resolvable:$true] %s276
          %282 = dma.hbm_to_vmem [thread:$0]  %s275, 8192, %s277, %s266, 256, 128, 8
        $region40: #{tpu_custom_call.1} parent=35 // pred_fallthru
          _
        // Predicated region
        $region41: #{tpu_custom_call.1} parent=35 // pred_check
          %p283 = pneg %p67
        $region42: #{tpu_custom_call.1} parent=35 // pred_check_branch
          %285 = sbr.rel (%p283) target = $region44
        $region43: #{tpu_custom_call.1} parent=35 // pred_region
          %s286 = sand.u32 %s21, 1
          %s287 = scalar_lea.sflag [#allocation7], %s286
          %s288 = sand.u32 %s57, 1
          %s289 = smul.addr %s288, 128
          %s290 = scalar_lea.vmem [#allocation6], %s289
          %s291 = smul.u32 16, %s21
          %293 = vsyncadd %s287, 0
          %s294 = smul.addr %s291, 2
          %s295 = smul.addr %s294, 4
          %s296 = scalar_lea.hbm %s1, %s295
          %s297 = sshll.u32 %s296, 4
          %s298 = int_to_ptr.hbm [resolvable:$true] %s297
          %s299 = sshll.u32 %s290, 4
          %s300 = int_to_ptr.vmem [resolvable:$true] %s299
          %305 = dma.hbm_to_vmem [thread:$0]  %s298, 2048, %s300, %s287, 128, 128, 8
        $region44: #{tpu_custom_call.1} parent=35 // pred_fallthru
          _
      $region36: #{tpu_custom_call.1} parent=5 // pred_fallthru
        _
      %p306 = scmp.le.s32.totalorder 1, %s21
      %p307 = scmp.lt.s32.totalorder %s21, 3
      %p308 = pnand %p306, %p307
      %p309 = pneg %p308
      // Predicated region
      $region45: #{tpu_custom_call.1} parent=5 // pred_check
        _
      $region46: #{tpu_custom_call.1} parent=5 // pred_check_branch
        %311 = sbr.rel (%p308) target = $region48
      $region47: #{tpu_custom_call.1} parent=5 // pred_region
        %s312 = ssub.s32 %s21, 1
        %s313 = sand.u32 %s34, 1
        %s314 = scalar_lea.sflag [#allocation4], %s313
        %s315 = sand.u32 %s34, 1
        %s316 = smul.addr %s315, 512
        %s317 = scalar_lea.vmem [#allocation3], %s316
        // Predicated region
        $region49: #{tpu_custom_call.1} parent=47 // pred_check
          %p318 = pneg %p47
        $region50: #{tpu_custom_call.1} parent=47 // pred_check_branch
          %320 = sbr.rel (%p318) target = $region52
        $region51: #{tpu_custom_call.1} parent=47 // pred_region
          %322 = dma.done %s314, 8192
        $region52: #{tpu_custom_call.1} parent=47 // pred_fallthru
          _
        %s323 = sand.u32 %s26, 1
        %s324 = scalar_lea.sflag [#allocation7], %s323
        %s325 = sand.u32 %s60, 1
        %s326 = smul.addr %s325, 128
        %s327 = scalar_lea.vmem [#allocation6], %s326
        // Predicated region
        $region53: #{tpu_custom_call.1} parent=47 // pred_check
          %p328 = pneg %p73
        $region54: #{tpu_custom_call.1} parent=47 // pred_check_branch
          %330 = sbr.rel (%p328) target = $region56
        $region55: #{tpu_custom_call.1} parent=47 // pred_region
          %332 = dma.done %s324, 2048
        $region56: #{tpu_custom_call.1} parent=47 // pred_fallthru
          _
        // Predicated region
        $region57: #{tpu_custom_call.1} parent=47 // pred_check
          %p333 = pneg %p94
        $region58: #{tpu_custom_call.1} parent=47 // pred_check_branch
          %335 = sbr.rel (%p333) target = $region60
        $region59: #{tpu_custom_call.1} parent=47 // pred_region
          %337 = dma.done [#allocation7], 32
        $region60: #{tpu_custom_call.1} parent=47 // pred_fallthru
          _
        // Predicated region
        $region61: #{tpu_custom_call.1} parent=47 // pred_check
          %p338 = pneg %p136
        $region62: #{tpu_custom_call.1} parent=47 // pred_check_branch
          %340 = sbr.rel (%p338) target = $region64
        $region63: #{tpu_custom_call.1} parent=47 // pred_region
          %342 = dma.done [#allocation10], 32
        $region64: #{tpu_custom_call.1} parent=47 // pred_fallthru
          _
        // Predicated region
        $region65: #{tpu_custom_call.1} parent=47 // pred_check
          %p343 = pneg %p157
        $region66: #{tpu_custom_call.1} parent=47 // pred_check_branch
          %345 = sbr.rel (%p343) target = $region68
        $region67: #{tpu_custom_call.1} parent=47 // pred_region
          %347 = dma.done [#allocation10], 2048
        $region68: #{tpu_custom_call.1} parent=47 // pred_fallthru
          _
        %s348 = sand.u32 %s34, 1
        %s349 = scalar_lea.sflag [#allocation4], %s348
        %s350 = sand.u32 %s34, 1
        %s351 = smul.addr %s350, 512
        %s352 = scalar_lea.vmem [#allocation3], %s351
        %p353 = pneg %p47
        %p354 = pneg %p44
        %s355 = sand.u32 %s26, 1
        %s356 = scalar_lea.sflag [#allocation7], %s355
        %s357 = sand.u32 %s60, 1
        %s358 = smul.addr %s357, 128
        %s359 = scalar_lea.vmem [#allocation6], %s358
        %p360 = pneg %p73
        %p361 = pneg %p70
        %p362 = pneg %p94
        %p363 = pneg %p91
        %p364 = pneg %p115
        %p365 = pneg %p112
        %p366 = pneg %p136
        %p367 = pneg %p133
        %p368 = pneg %p157
        %p369 = pneg %p154
        %p370 = pneg %p178
        %p371 = pneg %p175
        %p372 = pneg %p199
        %p373 = pneg %p196
        %s374 = smul.u32 16, %s26
        %p375 = scmp.eq.s32.totalorder %s26, 0
        // Predicated region
        $region69: #{tpu_custom_call.1} parent=47 // pred_check
          %p376 = pneg %p375
        $region70: #{tpu_custom_call.1} parent=47 // pred_check_branch
          %378 = sbr.rel (%p376) target = $region72
        $region71: #{tpu_custom_call.1} parent=47 // pred_region
          %379 = vst [vmem:[#allocation2] sm:$0xff] 0.0
          %380 = vst [vmem:[#allocation2 + $0x8] sm:$0xff] 0.0
        $region72: #{tpu_custom_call.1} parent=47 // pred_fallthru
          _
        %v381 = vld [vmem:[%s317] sm:$0xff]
        %v382 = vld [vmem:[%s317 + $0x8] sm:$0xff]
        %v383 = vld [vmem:[%s317 + $0x10] sm:$0xff]
        %v384 = vld [vmem:[%s317 + $0x18] sm:$0xff]
        %v385 = vld [vmem:[%s317 + $0x20] sm:$0xff]
        %v386 = vld [vmem:[%s317 + $0x28] sm:$0xff]
        %v387 = vld [vmem:[%s317 + $0x30] sm:$0xff]
        %v388 = vld [vmem:[%s317 + $0x38] sm:$0xff]
        %v389 = vld [vmem:[%s317 + $0x40] sm:$0xff]
        %v390 = vld [vmem:[%s317 + $0x48] sm:$0xff]
        %v391 = vld [vmem:[%s317 + $0x50] sm:$0xff]
        %v392 = vld [vmem:[%s317 + $0x58] sm:$0xff]
        %v393 = vld [vmem:[%s317 + $0x60] sm:$0xff]
        %v394 = vld [vmem:[%s317 + $0x68] sm:$0xff]
        %v395 = vld [vmem:[%s317 + $0x70] sm:$0xff]
        %v396 = vld [vmem:[%s317 + $0x78] sm:$0xff]
        %v397 = vld [vmem:[%s317 + $0x80] sm:$0xff]
        %v398 = vld [vmem:[%s317 + $0x88] sm:$0xff]
        %v399 = vld [vmem:[%s317 + $0x90] sm:$0xff]
        %v400 = vld [vmem:[%s317 + $0x98] sm:$0xff]
        %v401 = vld [vmem:[%s317 + $0xa0] sm:$0xff]
        %v402 = vld [vmem:[%s317 + $0xa8] sm:$0xff]
        %v403 = vld [vmem:[%s317 + $0xb0] sm:$0xff]
        %v404 = vld [vmem:[%s317 + $0xb8] sm:$0xff]
        %v405 = vld [vmem:[%s317 + $0xc0] sm:$0xff]
        %v406 = vld [vmem:[%s317 + $0xc8] sm:$0xff]
        %v407 = vld [vmem:[%s317 + $0xd0] sm:$0xff]
        %v408 = vld [vmem:[%s317 + $0xd8] sm:$0xff]
        %v409 = vld [vmem:[%s317 + $0xe0] sm:$0xff]
        %v410 = vld [vmem:[%s317 + $0xe8] sm:$0xff]
        %v411 = vld [vmem:[%s317 + $0xf0] sm:$0xff]
        %v412 = vld [vmem:[%s317 + $0xf8] sm:$0xff]
        %v413 = vld [vmem:[%s317 + $0x100] sm:$0xff]
        %v414 = vld [vmem:[%s317 + $0x108] sm:$0xff]
        %v415 = vld [vmem:[%s317 + $0x110] sm:$0xff]
        %v416 = vld [vmem:[%s317 + $0x118] sm:$0xff]
        %v417 = vld [vmem:[%s317 + $0x120] sm:$0xff]
        %v418 = vld [vmem:[%s317 + $0x128] sm:$0xff]
        %v419 = vld [vmem:[%s317 + $0x130] sm:$0xff]
        %v420 = vld [vmem:[%s317 + $0x138] sm:$0xff]
        %v421 = vld [vmem:[%s317 + $0x140] sm:$0xff]
        %v422 = vld [vmem:[%s317 + $0x148] sm:$0xff]
        %v423 = vld [vmem:[%s317 + $0x150] sm:$0xff]
        %v424 = vld [vmem:[%s317 + $0x158] sm:$0xff]
        %v425 = vld [vmem:[%s317 + $0x160] sm:$0xff]
        %v426 = vld [vmem:[%s317 + $0x168] sm:$0xff]
        %v427 = vld [vmem:[%s317 + $0x170] sm:$0xff]
        %v428 = vld [vmem:[%s317 + $0x178] sm:$0xff]
        %v429 = vld [vmem:[%s317 + $0x180] sm:$0xff]
        %v430 = vld [vmem:[%s317 + $0x188] sm:$0xff]
        %v431 = vld [vmem:[%s317 + $0x190] sm:$0xff]
        %v432 = vld [vmem:[%s317 + $0x198] sm:$0xff]
        %v433 = vld [vmem:[%s317 + $0x1a0] sm:$0xff]
        %v434 = vld [vmem:[%s317 + $0x1a8] sm:$0xff]
        %v435 = vld [vmem:[%s317 + $0x1b0] sm:$0xff]
        %v436 = vld [vmem:[%s317 + $0x1b8] sm:$0xff]
        %v437 = vld [vmem:[%s317 + $0x1c0] sm:$0xff]
        %v438 = vld [vmem:[%s317 + $0x1c8] sm:$0xff]
        %v439 = vld [vmem:[%s317 + $0x1d0] sm:$0xff]
        %v440 = vld [vmem:[%s317 + $0x1d8] sm:$0xff]
        %v441 = vld [vmem:[%s317 + $0x1e0] sm:$0xff]
        %v442 = vld [vmem:[%s317 + $0x1e8] sm:$0xff]
        %v443 = vld [vmem:[%s317 + $0x1f0] sm:$0xff]
        %v444 = vld [vmem:[%s317 + $0x1f8] sm:$0xff]
        %v445 = vadd.f32 %v381, %v382
        %v446 = vadd.f32 %v445, %v383
        %v447 = vadd.f32 %v446, %v384
        %v448 = vadd.f32 %v447, %v385
        %v449 = vadd.f32 %v448, %v386
        %v450 = vadd.f32 %v449, %v387
        %v451 = vadd.f32 %v450, %v388
        %v452 = vrot.slane %v451, 4
        %v453 = vadd.f32 %v451, %v452
        %v454 = vrot.slane %v453, 2
        %v455 = vadd.f32 %v453, %v454
        %v456 = vrot.slane %v455, 1
        %v457 = vadd.f32 %v455, %v456
        %v458 = vadd.f32 %v389, %v390
        %v459 = vadd.f32 %v458, %v391
        %v460 = vadd.f32 %v459, %v392
        %v461 = vadd.f32 %v460, %v393
        %v462 = vadd.f32 %v461, %v394
        %v463 = vadd.f32 %v462, %v395
        %v464 = vadd.f32 %v463, %v396
        %v465 = vrot.slane %v464, 4
        %v466 = vadd.f32 %v464, %v465
        %v467 = vrot.slane %v466, 2
        %v468 = vadd.f32 %v466, %v467
        %v469 = vrot.slane %v468, 1
        %v470 = vadd.f32 %v468, %v469
        %v471 = vadd.f32 %v397, %v398
        %v472 = vadd.f32 %v471, %v399
        %v473 = vadd.f32 %v472, %v400
        %v474 = vadd.f32 %v473, %v401
        %v475 = vadd.f32 %v474, %v402
        %v476 = vadd.f32 %v475, %v403
        %v477 = vadd.f32 %v476, %v404
        %v478 = vrot.slane %v477, 4
        %v479 = vadd.f32 %v477, %v478
        %v480 = vrot.slane %v479, 2
        %v481 = vadd.f32 %v479, %v480
        %v482 = vrot.slane %v481, 1
        %v483 = vadd.f32 %v481, %v482
        %v484 = vadd.f32 %v405, %v406
        %v485 = vadd.f32 %v484, %v407
        %v486 = vadd.f32 %v485, %v408
        %v487 = vadd.f32 %v486, %v409
        %v488 = vadd.f32 %v487, %v410
        %v489 = vadd.f32 %v488, %v411
        %v490 = vadd.f32 %v489, %v412
        %v491 = vrot.slane %v490, 4
        %v492 = vadd.f32 %v490, %v491
        %v493 = vrot.slane %v492, 2
        %v494 = vadd.f32 %v492, %v493
        %v495 = vrot.slane %v494, 1
        %v496 = vadd.f32 %v494, %v495
        %v497 = vadd.f32 %v413, %v414
        %v498 = vadd.f32 %v497, %v415
        %v499 = vadd.f32 %v498, %v416
        %v500 = vadd.f32 %v499, %v417
        %v501 = vadd.f32 %v500, %v418
        %v502 = vadd.f32 %v501, %v419
        %v503 = vadd.f32 %v502, %v420
        %v504 = vrot.slane %v503, 4
        %v505 = vadd.f32 %v503, %v504
        %v506 = vrot.slane %v505, 2
        %v507 = vadd.f32 %v505, %v506
        %v508 = vrot.slane %v507, 1
        %v509 = vadd.f32 %v507, %v508
        %v510 = vadd.f32 %v421, %v422
        %v511 = vadd.f32 %v510, %v423
        %v512 = vadd.f32 %v511, %v424
        %v513 = vadd.f32 %v512, %v425
        %v514 = vadd.f32 %v513, %v426
        %v515 = vadd.f32 %v514, %v427
        %v516 = vadd.f32 %v515, %v428
        %v517 = vrot.slane %v516, 4
        %v518 = vadd.f32 %v516, %v517
        %v519 = vrot.slane %v518, 2
        %v520 = vadd.f32 %v518, %v519
        %v521 = vrot.slane %v520, 1
        %v522 = vadd.f32 %v520, %v521
        %v523 = vadd.f32 %v429, %v430
        %v524 = vadd.f32 %v523, %v431
        %v525 = vadd.f32 %v524, %v432
        %v526 = vadd.f32 %v525, %v433
        %v527 = vadd.f32 %v526, %v434
        %v528 = vadd.f32 %v527, %v435
        %v529 = vadd.f32 %v528, %v436
        %v530 = vrot.slane %v529, 4
        %v531 = vadd.f32 %v529, %v530
        %v532 = vrot.slane %v531, 2
        %v533 = vadd.f32 %v531, %v532
        %v534 = vrot.slane %v533, 1
        %v535 = vadd.f32 %v533, %v534
        %v536 = vadd.f32 %v437, %v438
        %v537 = vadd.f32 %v536, %v439
        %v538 = vadd.f32 %v537, %v440
        %v539 = vadd.f32 %v538, %v441
        %v540 = vadd.f32 %v539, %v442
        %v541 = vadd.f32 %v540, %v443
        %v542 = vadd.f32 %v541, %v444
        %v543 = vrot.slane %v542, 4
        %v544 = vadd.f32 %v542, %v543
        %v545 = vrot.slane %v544, 2
        %v546 = vadd.f32 %v544, %v545
        %v547 = vrot.slane %v546, 1
        %v548 = vadd.f32 %v546, %v547
        %v549 = vmul.f32 %v457, 0.015625
        %v550 = vmul.f32 %v470, 0.015625
        %v551 = vmul.f32 %v483, 0.015625
        %v552 = vmul.f32 %v496, 0.015625
        %v553 = vmul.f32 %v509, 0.015625
        %v554 = vmul.f32 %v522, 0.015625
        %v555 = vmul.f32 %v535, 0.015625
        %v556 = vmul.f32 %v548, 0.015625
        %v557 = vld [vmem:[#allocation2] sm:$0xff]
        %v558 = vld [vmem:[#allocation2 + $0x8] sm:$0xff]
        %v559 = vpack.c.bf16 %v549, %v549
        %v560 = vpack.c.bf16 %v550, %v550
        %v561 = vpack.c.bf16 %v551, %v551
        %v562 = vpack.c.bf16 %v552, %v552
        %v563 = vpack.c.bf16 %v553, %v553
        %v564 = vpack.c.bf16 %v554, %v554
        %v565 = vpack.c.bf16 %v555, %v555
        %v566 = vpack.c.bf16 %v556, %v556
        %v567 = vld [vmem:[%s327] sm:$0xff]
        %v568 = vld [vmem:[%s327 + $0x8] sm:$0xff]
        %v569 = vld [vmem:[%s327 + $0x10] sm:$0xff]
        %v570 = vld [vmem:[%s327 + $0x18] sm:$0xff]
        %v571 = vld [vmem:[%s327 + $0x20] sm:$0xff]
        %v572 = vld [vmem:[%s327 + $0x28] sm:$0xff]
        %v573 = vld [vmem:[%s327 + $0x30] sm:$0xff]
        %v574 = vld [vmem:[%s327 + $0x38] sm:$0xff]
        %v575 = vld [vmem:[%s327 + $0x40] sm:$0xff]
        %v576 = vld [vmem:[%s327 + $0x48] sm:$0xff]
        %v577 = vld [vmem:[%s327 + $0x50] sm:$0xff]
        %v578 = vld [vmem:[%s327 + $0x58] sm:$0xff]
        %v579 = vld [vmem:[%s327 + $0x60] sm:$0xff]
        %v580 = vld [vmem:[%s327 + $0x68] sm:$0xff]
        %v581 = vld [vmem:[%s327 + $0x70] sm:$0xff]
        %v582 = vld [vmem:[%s327 + $0x78] sm:$0xff]
        %v591 = vunpack.c.l.b16 %v559
        %v592 = vunpack.c.l.b16 %v560
        %v593 = vunpack.c.l.b16 %v561
        %v594 = vunpack.c.l.b16 %v562
        %v595 = vunpack.c.l.b16 %v563
        %v596 = vunpack.c.l.b16 %v564
        %v597 = vunpack.c.l.b16 %v565
        %v598 = vunpack.c.l.b16 %v566
        %vm599 = vcmask 1041409
        %v600 = vsel %vm599, %v592, %v591
        %vm601 = vcmask 1042434
        %v602 = vsel %vm601, %v593, %v600
        %vm603 = vcmask 1043459
        %v604 = vsel %vm603, %v594, %v602
        %vm605 = vcmask 1044484
        %v606 = vsel %vm605, %v595, %v604
        %vm607 = vcmask 1045509
        %v608 = vsel %vm607, %v596, %v606
        %vm609 = vcmask 1046534
        %v610 = vsel %vm609, %v597, %v608
        %vm611 = vcmask 1047559
        %v612 = vsel %vm611, %v598, %v610
        %v613 = vpack.c.b16 %v612, %v612
        %v631 = vunpack.c.l.b16 %v567
        %v632 = vunpack.c.h.b16 %v567
        %v633 = vunpack.c.l.b16 %v568
        %v634 = vunpack.c.h.b16 %v568
        %v635 = vunpack.c.l.b16 %v569
        %v636 = vunpack.c.h.b16 %v569
        %v637 = vunpack.c.l.b16 %v570
        %v638 = vunpack.c.h.b16 %v570
        %v639 = vunpack.c.l.b16 %v571
        %v640 = vunpack.c.h.b16 %v571
        %v641 = vunpack.c.l.b16 %v572
        %v642 = vunpack.c.h.b16 %v572
        %v643 = vunpack.c.l.b16 %v573
        %v644 = vunpack.c.h.b16 %v573
        %v645 = vunpack.c.l.b16 %v574
        %v646 = vunpack.c.h.b16 %v574
        %v647 = vunpack.c.l.b16 %v575
        %v648 = vunpack.c.h.b16 %v575
        %v649 = vunpack.c.l.b16 %v576
        %v650 = vunpack.c.h.b16 %v576
        %v651 = vunpack.c.l.b16 %v577
        %v652 = vunpack.c.h.b16 %v577
        %v653 = vunpack.c.l.b16 %v578
        %v654 = vunpack.c.h.b16 %v578
        %v655 = vunpack.c.l.b16 %v579
        %v656 = vunpack.c.h.b16 %v579
        %v657 = vunpack.c.l.b16 %v580
        %v658 = vunpack.c.h.b16 %v580
        %v659 = vunpack.c.l.b16 %v581
        %v660 = vunpack.c.h.b16 %v581
        %v661 = vunpack.c.l.b16 %v582
        %v662 = vunpack.c.h.b16 %v582
        %v663 = vpack.c.b16 %v633, %v631
        %v664 = vpack.c.b16 %v634, %v632
        %v665 = vpack.c.b16 %v637, %v635
        %v666 = vpack.c.b16 %v638, %v636
        %v667 = vpack.c.b16 %v641, %v639
        %v668 = vpack.c.b16 %v642, %v640
        %v669 = vpack.c.b16 %v645, %v643
        %v670 = vpack.c.b16 %v646, %v644
        %v671 = vpack.c.b16 %v649, %v647
        %v672 = vpack.c.b16 %v650, %v648
        %v673 = vpack.c.b16 %v653, %v651
        %v674 = vpack.c.b16 %v654, %v652
        %v675 = vpack.c.b16 %v657, %v655
        %v676 = vpack.c.b16 %v658, %v656
        %v677 = vpack.c.b16 %v661, %v659
        %v678 = vpack.c.b16 %v662, %v660
        %695 = vmatpush.bf16.msra.mxu0 %v677
        %696 = vmatpush.bf16.msra.mxu0 %v675
        %697 = vmatpush.bf16.msra.mxu0 %v673
        %698 = vmatpush.bf16.msra.mxu0 %v671
        %699 = vmatpush.bf16.msra.mxu0 %v669
        %700 = vmatpush.bf16.msra.mxu0 %v667
        %701 = vmatpush.bf16.msra.mxu0 %v665
        %702 = vmatpush.bf16.msra.mxu0 %v663
        %703 = vmatmul.bf16.gmra.mxu0 %v613
        %v704 = vpop.f32.mrf.mxu0
        %v705 = vadd.f32 0.0, %v704
        %v706 = vpop.f32.mrf.mxu0
        %707 = vdwg.mxu0
        %708 = vmatpush.bf16.msra.mxu0 %v678
        %709 = vmatpush.bf16.msra.mxu0 %v676
        %710 = vmatpush.bf16.msra.mxu0 %v674
        %711 = vmatpush.bf16.msra.mxu0 %v672
        %712 = vmatpush.bf16.msra.mxu0 %v670
        %713 = vmatpush.bf16.msra.mxu0 %v668
        %714 = vmatpush.bf16.msra.mxu0 %v666
        %715 = vmatpush.bf16.msra.mxu0 %v664
        %716 = vmatmul.bf16.gmra.mxu0 %v613
        %v717 = vpop.f32.mrf.mxu0
        %v718 = vadd.f32 0.0, %v717
        %v719 = vpop.f32.mrf.mxu0
        %720 = vdwg.mxu0
        %v721 = vadd.f32 %v557, %v705
        %v722 = vadd.f32 %v558, %v718
        %723 = vst [vmem:[#allocation2] sm:$0xff] %v721
        %724 = vst [vmem:[#allocation2 + $0x8] sm:$0xff] %v722
        %p725 = scmp.eq.s32.totalorder %s26, 1
        // Predicated region
        $region73: #{tpu_custom_call.1} parent=47 // pred_check
          %p726 = pneg %p725
        $region74: #{tpu_custom_call.1} parent=47 // pred_check_branch
          %728 = sbr.rel (%p726) target = $region76
        $region75: #{tpu_custom_call.1} parent=47 // pred_region
          %v729 = vld [vmem:[#allocation2] sm:$0xff]
          %v730 = vld [vmem:[#allocation2 + $0x8] sm:$0xff]
          %v731 = vld [vmem:[#allocation8] sm:$0x3]
          %v733 = vperm.slane %v731, 0
          %v734 = vperm.slane %v731, 1
          %v737 = vadd.f32 %v729, %v733
          %v738 = vadd.f32 %v730, %v734
          %v739 = vrot.slane %v737, 4
          %v740 = vadd.f32 %v737, %v739
          %v741 = vrot.slane %v740, 2
          %v742 = vadd.f32 %v740, %v741
          %v743 = vrot.slane %v742, 1
          %v744 = vadd.f32 %v742, %v743
          %v745 = vrot.slane %v738, 4
          %v746 = vadd.f32 %v738, %v745
          %v747 = vrot.slane %v746, 2
          %v748 = vadd.f32 %v746, %v747
          %v749 = vrot.slane %v748, 1
          %v750 = vadd.f32 %v748, %v749
          %v751 = vrcp.pop 8.0
          %v752 = vmul.f32 8.0, %v751
          %v753 = vsub.f32 1.0, %v752
          %v754 = vmul.f32 %v751, %v753
          %v755 = vadd.f32 %v751, %v754
          %vm756 = vweird.f32 %v751
          %v757 = vsel %vm756, %v751, %v755
          %v758 = vmul.f32 %v744, %v757
          %v759 = vmul.f32 %v750, %v757
          %v760 = vsub.f32 %v737, %v758
          %v761 = vsub.f32 %v738, %v759
          %v762 = vmul.f32 %v760, %v760
          %v763 = vmul.f32 %v761, %v761
          %v764 = vrot.slane %v762, 4
          %v765 = vadd.f32 %v762, %v764
          %v766 = vrot.slane %v765, 2
          %v767 = vadd.f32 %v765, %v766
          %v768 = vrot.slane %v767, 1
          %v769 = vadd.f32 %v767, %v768
          %v770 = vrot.slane %v763, 4
          %v771 = vadd.f32 %v763, %v770
          %v772 = vrot.slane %v771, 2
          %v773 = vadd.f32 %v771, %v772
          %v774 = vrot.slane %v773, 1
          %v775 = vadd.f32 %v773, %v774
          %v776 = vmul.f32 %v769, %v757
          %v777 = vmul.f32 %v775, %v757
          %v778 = vadd.f32 %v776, 1e-05
          %v779 = vadd.f32 %v777, 1e-05
          %v780 = vrsqrt.pop %v778
          %v781 = vmul.f32 %v780, %v778
          %v782 = vmul.f32 %v781, %v780
          %v783 = vmul.f32 0.5, %v782
          %v784 = vsub.f32 1.5, %v783
          %v785 = vmul.f32 %v780, %v784
          %vm786 = vweird.f32 %v778
          %vm787 = vweird.f32 %v780
          %vm788 = vmor %vm786, %vm787
          %v789 = vsel %vm788, %v780, %v785
          %v790 = vrsqrt.pop %v779
          %v791 = vmul.f32 %v790, %v779
          %v792 = vmul.f32 %v791, %v790
          %v793 = vmul.f32 0.5, %v792
          %v794 = vsub.f32 1.5, %v793
          %v795 = vmul.f32 %v790, %v794
          %vm796 = vweird.f32 %v779
          %vm797 = vweird.f32 %v790
          %vm798 = vmor %vm796, %vm797
          %v799 = vsel %vm798, %v790, %v795
          %v800 = vmul.f32 %v760, %v789
          %v801 = vmul.f32 %v761, %v799
          %v802 = vld [vmem:[%s3] sm:$0x3]
          %v804 = vperm.slane %v802, 0
          %v805 = vperm.slane %v802, 1
          %v808 = vmul.f32 %v800, %v804
          %v809 = vmul.f32 %v801, %v805
          %v810 = vld [vmem:[#allocation9] sm:$0x3]
          %v812 = vperm.slane %v810, 0
          %v813 = vperm.slane %v810, 1
          %v816 = vadd.f32 %v808, %v812
          %v817 = vadd.f32 %v809, %v813
          %v818 = vmax.f32 %v816, 0.0
          %v819 = vmax.f32 %v817, 0.0
          %v820 = vpack.c.bf16 %v818, %v818
          %v821 = vpack.c.bf16 %v819, %v819
          %v822 = vld [vmem:[#allocation11] sm:$0xf]
          %v823 = vld [vmem:[#allocation11 + $0x4] sm:$0xf]
          %v824 = vld [vmem:[#allocation11 + $0x8] sm:$0xf]
          %v825 = vld [vmem:[#allocation11 + $0xc] sm:$0xf]
          %v826 = vld [vmem:[#allocation11 + $0x10] sm:$0xf]
          %v827 = vld [vmem:[#allocation11 + $0x14] sm:$0xf]
          %v828 = vld [vmem:[#allocation11 + $0x18] sm:$0xf]
          %v829 = vld [vmem:[#allocation11 + $0x1c] sm:$0xf]
          %v830 = vld [vmem:[#allocation11 + $0x20] sm:$0xf]
          %v831 = vld [vmem:[#allocation11 + $0x24] sm:$0xf]
          %v832 = vld [vmem:[#allocation11 + $0x28] sm:$0xf]
          %v833 = vld [vmem:[#allocation11 + $0x2c] sm:$0xf]
          %v834 = vld [vmem:[#allocation11 + $0x30] sm:$0xf]
          %v835 = vld [vmem:[#allocation11 + $0x34] sm:$0xf]
          %v836 = vld [vmem:[#allocation11 + $0x38] sm:$0xf]
          %v837 = vld [vmem:[#allocation11 + $0x3c] sm:$0xf]
          %v838 = vld [vmem:[#allocation11 + $0x40] sm:$0xf]
          %v839 = vld [vmem:[#allocation11 + $0x44] sm:$0xf]
          %v840 = vld [vmem:[#allocation11 + $0x48] sm:$0xf]
          %v841 = vld [vmem:[#allocation11 + $0x4c] sm:$0xf]
          %v842 = vld [vmem:[#allocation11 + $0x50] sm:$0xf]
          %v843 = vld [vmem:[#allocation11 + $0x54] sm:$0xf]
          %v844 = vld [vmem:[#allocation11 + $0x58] sm:$0xf]
          %v845 = vld [vmem:[#allocation11 + $0x5c] sm:$0xf]
          %v846 = vld [vmem:[#allocation11 + $0x60] sm:$0xf]
          %v847 = vld [vmem:[#allocation11 + $0x64] sm:$0xf]
          %v848 = vld [vmem:[#allocation11 + $0x68] sm:$0xf]
          %v849 = vld [vmem:[#allocation11 + $0x6c] sm:$0xf]
          %v850 = vld [vmem:[#allocation11 + $0x70] sm:$0xf]
          %v851 = vld [vmem:[#allocation11 + $0x74] sm:$0xf]
          %v852 = vld [vmem:[#allocation11 + $0x78] sm:$0xf]
          %v853 = vld [vmem:[#allocation11 + $0x7c] sm:$0xf]
          %v854 = vld [vmem:[%s6] sm:$0x1]
          %v856 = vperm.slane %v854, 0
          %v890 = vunpack.c.l.b16 %v822
          %v891 = vunpack.c.l.b16 %v823
          %v892 = vunpack.c.l.b16 %v824
          %v893 = vunpack.c.l.b16 %v825
          %v894 = vunpack.c.l.b16 %v826
          %v895 = vunpack.c.l.b16 %v827
          %v896 = vunpack.c.l.b16 %v828
          %v897 = vunpack.c.l.b16 %v829
          %v898 = vunpack.c.l.b16 %v830
          %v899 = vunpack.c.l.b16 %v831
          %v900 = vunpack.c.l.b16 %v832
          %v901 = vunpack.c.l.b16 %v833
          %v902 = vunpack.c.l.b16 %v834
          %v903 = vunpack.c.l.b16 %v835
          %v904 = vunpack.c.l.b16 %v836
          %v905 = vunpack.c.l.b16 %v837
          %v906 = vunpack.c.l.b16 %v838
          %v907 = vunpack.c.l.b16 %v839
          %v908 = vunpack.c.l.b16 %v840
          %v909 = vunpack.c.l.b16 %v841
          %v910 = vunpack.c.l.b16 %v842
          %v911 = vunpack.c.l.b16 %v843
          %v912 = vunpack.c.l.b16 %v844
          %v913 = vunpack.c.l.b16 %v845
          %v914 = vunpack.c.l.b16 %v846
          %v915 = vunpack.c.l.b16 %v847
          %v916 = vunpack.c.l.b16 %v848
          %v917 = vunpack.c.l.b16 %v849
          %v918 = vunpack.c.l.b16 %v850
          %v919 = vunpack.c.l.b16 %v851
          %v920 = vunpack.c.l.b16 %v852
          %v921 = vunpack.c.l.b16 %v853
          %v922 = vpack.c.b16 %v891, %v890
          %v923 = vpack.c.b16 %v893, %v892
          %v924 = vpack.c.b16 %v895, %v894
          %v925 = vpack.c.b16 %v897, %v896
          %v926 = vpack.c.b16 %v899, %v898
          %v927 = vpack.c.b16 %v901, %v900
          %v928 = vpack.c.b16 %v903, %v902
          %v929 = vpack.c.b16 %v905, %v904
          %v930 = vpack.c.b16 %v907, %v906
          %v931 = vpack.c.b16 %v909, %v908
          %v932 = vpack.c.b16 %v911, %v910
          %v933 = vpack.c.b16 %v913, %v912
          %v934 = vpack.c.b16 %v915, %v914
          %v935 = vpack.c.b16 %v917, %v916
          %v936 = vpack.c.b16 %v919, %v918
          %v937 = vpack.c.b16 %v921, %v920
          %954 = vmatpush.bf16.msra.mxu0 %v929
          %955 = vmatpush.bf16.msra.mxu0 %v928
          %956 = vmatpush.bf16.msra.mxu0 %v927
          %957 = vmatpush.bf16.msra.mxu0 %v926
          %958 = vmatpush.bf16.msra.mxu0 %v925
          %959 = vmatpush.bf16.msra.mxu0 %v924
          %960 = vmatpush.bf16.msra.mxu0 %v923
          %961 = vmatpush.bf16.msra.mxu0 %v922
          %962 = vmatmul.bf16.gmra.mxu0 %v820
          %v963 = vpop.f32.mrf.mxu0
          %v964 = vadd.f32 %v856, %v963
          %v965 = vpop.f32.mrf.mxu0
          %966 = vdwg.mxu0
          %967 = vmatpush.bf16.msra.mxu0 %v937
          %968 = vmatpush.bf16.msra.mxu0 %v936
          %969 = vmatpush.bf16.msra.mxu0 %v935
          %970 = vmatpush.bf16.msra.mxu0 %v934
          %971 = vmatpush.bf16.msra.mxu0 %v933
          %972 = vmatpush.bf16.msra.mxu0 %v932
          %973 = vmatpush.bf16.msra.mxu0 %v931
          %974 = vmatpush.bf16.msra.mxu0 %v930
          %975 = vmatmul.bf16.gmra.mxu0 %v821
          %v976 = vpop.f32.mrf.mxu0
          %v977 = vadd.f32 %v964, %v976
          %v978 = vpop.f32.mrf.mxu0
          %979 = vdwg.mxu0
          %980 = vst [vmem:[#allocation12] sm:$0xff] %v977
        $region76: #{tpu_custom_call.1} parent=47 // pred_fallthru
          _
        // Predicated region
        $region77: #{tpu_custom_call.1} parent=47 // pred_check
          %p981 = pneg %p196
        $region78: #{tpu_custom_call.1} parent=47 // pred_check_branch
          %983 = sbr.rel (%p981) target = $region80
        $region79: #{tpu_custom_call.1} parent=47 // pred_region
          %985 = vsyncadd [#allocation5], 0
          %s987 = sshll.u32 [#allocation12], 4
          %s988 = int_to_ptr.vmem [resolvable:$true] %s987
          %s989 = sshll.u32 %s7, 4
          %s990 = int_to_ptr.hbm [resolvable:$true] %s989
          %992 = dma.vmem_to_hbm [thread:$0]  %s988, 128, %s990, [#allocation5]
        $region80: #{tpu_custom_call.1} parent=47 // pred_fallthru
          _
        // Predicated region
        $region81: #{tpu_custom_call.1} parent=47 // pred_check
          %p993 = pneg %p196
        $region82: #{tpu_custom_call.1} parent=47 // pred_check_branch
          %995 = sbr.rel (%p993) target = $region84
        $region83: #{tpu_custom_call.1} parent=47 // pred_region
          %997 = dma.done [#allocation5], 128
        $region84: #{tpu_custom_call.1} parent=47 // pred_fallthru
          _
      $region48: #{tpu_custom_call.1} parent=5 // pred_fallthru
        _
      %p998 = scmp.le.s32.totalorder 2, %s21
      // Predicated region
      $region85: #{tpu_custom_call.1} parent=5 // pred_check
        %p999 = pneg %p998
      $region86: #{tpu_custom_call.1} parent=5 // pred_check_branch
        %1001 = sbr.rel (%p999) target = $region88
      $region87: #{tpu_custom_call.1} parent=5 // pred_region
        %s1002 = ssub.s32 %s21, 2
      $region88: #{tpu_custom_call.1} parent=5 // pred_fallthru
        _
    $region6: #{tpu_custom_call.1} parent=1 // loop_footer
      %s25 = sadd.s32 1, %s21
    $region7: #{tpu_custom_call.1} parent=1 // loop_footer_branch
      %20 = sbr.rel target = $region3
    $region8: #{tpu_custom_call.1} parent=1 // loop_exit
      _
    %1003 = vsyncpa [#allocation4], 1
    %s1004 = scalar_lea.sflag [#allocation4], 1
    %1005 = vsyncpa %s1004, 1
    %1006 = vsyncpa [#allocation7], 1
    %s1007 = scalar_lea.sflag [#allocation7], 1
    %1008 = vsyncpa %s1007, 1
    %1009 = vsyncpa [#allocation10], 1
    %1010 = vsyncpa [#allocation5], 1
    %s1011 = scalar_lea.sflag [#allocation5], 1
    %1012 = vsyncpa %s1011, 1

</llo_original>
